<compile_context>
chip_gen: v5e
topology: v5e:2x2
jax: 0.10.0
libtpu: 0.0.40
codegen_flags: <defaults>
</compile_context>

<pallas_src>
import functools

import numpy as np

import jax
import jax.numpy as jnp
from jax import lax
from jax.experimental import pallas as pl
from jax.experimental.pallas import tpu as pltpu


def _kmeans_kernel(x_ref, c0_ref, out_ref, *, max_iter: int, n_clusters: int):
    # x_ref  : (Bt, N, D) block  -> Bt batch elements
    # c0_ref : (Bt, K, D) block  -> initial centers for those batch elements
    # out_ref: (Bt, K, D) block  -> final centers
    bt, n, d = x_ref.shape
    k = n_clusters

    c = c0_ref[...].astype(jnp.float32)                      # (Bt, K, D) f32 carry
    # Loop-invariant, small: K-index iota in (K, N) layout.
    iota_kn = lax.broadcasted_iota(jnp.int32, (bt, k, n), 1)  # (Bt, K, N)

    def body(_, c):
        # Re-read the VMEM-resident tile each iteration (keeps it out of the
        # loop-carried live set). Cast is a no-op for f32 inputs; for bf16
        # inputs the MXU still accumulates in f32 via preferred_element_type.
        x = x_ref[...].astype(jnp.float32)                   # (Bt, N, D)

        # Squared-distance argmin (identical argmin to torch.cdist + argmin):
        #   dist[k, n] = ||c_k||^2 - 2 * <c_k, x_n>     (||x_n||^2 dropped)
        c_sq = jnp.sum(c * c, axis=-1, keepdims=True)        # (Bt, K, 1)
        cross = jnp.einsum('bkd,bnd->bkn', c, x,
                           preferred_element_type=jnp.float32)   # (Bt, K, N)
        dist = c_sq - 2.0 * cross                            # (Bt, K, N)

        # argmin over K (sublane axis) with first-index tie-breaking
        # (matches torch.argmin), producing the one-hot directly in (K, N).
        min_d = jnp.min(dist, axis=1, keepdims=True)         # (Bt, 1, N)
        idx = jnp.min(jnp.where(dist <= min_d, iota_kn, k),
                      axis=1, keepdims=True)                 # (Bt, 1, N) int32
        onehot_kn = (iota_kn == idx).astype(jnp.float32)     # (Bt, K, N)

        # Cluster sizes: cheap lane-axis reduce. New centers: natural-orientation
        # MXU matmul (K, N) x (N, D).
        sizes = jnp.sum(onehot_kn, axis=-1, keepdims=True)   # (Bt, K, 1)
        new_c = jnp.einsum('bkn,bnd->bkd', onehot_kn, x,
                           preferred_element_type=jnp.float32)   # (Bt, K, D)

        # centers /= clamp(sizes, min=1): empty cluster -> 0/1 -> origin,
        # matching the torch reference. Reciprocal routes to the EUP slot.
        inv = pl.reciprocal(jnp.maximum(sizes, 1.0), approx=False)
        return new_c * inv

    c = lax.fori_loop(0, max_iter, body, c)
    out_ref[...] = c.astype(out_ref.dtype)


def kmeans_forward(x: jax.Array,
                   key: jax.Array,
                   *,
                   max_iter: int = 100,
                   n_clusters: int = 8,
                   batch_tile: int | None = None) -> jax.Array:
    """KMeans.forward equivalent.

    Args:
        x: (*BS, N, D) float array.
        key: PRNG key used for the random-index center initialization.
        batch_tile: batch elements fused per grid step (None = auto).

    Returns:
        (*BS, n_clusters, D) final cluster centers (float32).
    """
    if not n_clusters:
        return x

    *bs, n, d = x.shape
    b = int(np.prod(bs)) if bs else 1
    x3 = x.reshape(b, n, d)

    # _init_rnd: same random indices shared across the batch, with replacement.
    # TODO(synk): torch.Generator randint stream has no JAX equivalent; same
    # distribution via jax.random.randint.
    indices = jax.random.randint(key, (n_clusters,), 0, n)
    init_centers = jnp.take(x3, indices, axis=-2).astype(jnp.float32)  # (B, K, D)

    # Batch fusion: largest divisor of B that still leaves >= 2 grid steps
    # (fills pipelines on single-TC v5e/v6e, keeps both v7x TCs busy).
    if batch_tile is None:
        if b <= 1:
            batch_tile = 1
        else:
            batch_tile = max(t for t in range(1, b // 2 + 1) if b % t == 0)
    assert b % batch_tile == 0, "batch_tile must divide the flattened batch"
    bt = batch_tile

    kernel = functools.partial(
        _kmeans_kernel, max_iter=max_iter, n_clusters=n_clusters)

    # Explicit scoped-VMEM budget: double-buffered x block (native dtype),
    # in/out center blocks, in-kernel f32 copy of x, and (K, N) temporaries.
    f32 = 4
    est = (2 * bt * n * d * x.dtype.itemsize      # x block, double-buffered
           + 4 * bt * n_clusters * d * f32        # init/out center blocks
           + bt * n * d * f32                     # f32 working copy of x tile
           + 8 * bt * n_clusters * n * f32        # (K, N) temps
           + (4 << 20))                           # headroom
    vmem_limit = int(min(max(est, 32 << 20), 64 << 20))

    out = pl.pallas_call(
        kernel,
        out_shape=jax.ShapeDtypeStruct((b, n_clusters, d), jnp.float32),
        grid_spec=pltpu.PrefetchScalarGridSpec(
            num_scalar_prefetch=0,
            grid=(b // bt,),
            in_specs=[
                # x stays in its native dtype (no wrapper upcast): halves
                # HBM->VMEM bytes and the resident block for bf16 inputs.
                pl.BlockSpec((bt, n, d), lambda i: (i, 0, 0)),
                pl.BlockSpec((bt, n_clusters, d), lambda i: (i, 0, 0)),
            ],
            out_specs=pl.BlockSpec((bt, n_clusters, d), lambda i: (i, 0, 0)),
        ),
        compiler_params=pltpu.CompilerParams(
            dimension_semantics=("parallel",),
            vmem_limit_bytes=vmem_limit),
    )(x3, init_centers)

    return out.reshape(*bs, n_clusters, d) if bs else out.reshape(n_clusters, d)


if __name__ == "__main__":
    key = jax.random.PRNGKey(0)
    k_data, k_init = jax.random.split(key)

    B, N, D = 2, 64, 32
    N_CLUSTERS = 8
    MAX_ITER = 100

    x = jax.random.normal(k_data, (B, N, D), dtype=jnp.float32)

    centers = kmeans_forward(
        x, k_init, max_iter=MAX_ITER, n_clusters=N_CLUSTERS)
    centers = jax.block_until_ready(centers)

    assert centers.shape == (B, N_CLUSTERS, D)
    assert bool(jnp.all(jnp.isfinite(centers)))
    print("KERNEL_OK")
</pallas_src>

<mosaic_0001>
module attributes {stable_mosaic.version = 11 : i64} {
  func.func @_kmeans_kernel(%arg0: i32, %arg1: memref<1x64x32xf32, #tpu.memory_space<vmem>>, %arg2: memref<1x8x32xf32, #tpu.memory_space<vmem>>, %arg3: memref<1x8x32xf32, #tpu.memory_space<vmem>>) attributes {dimension_semantics = [#tpu.dimension_semantics<parallel>], iteration_bounds = array<i64: 2>, scalar_prefetch = 0 : i64, scratch_operands = 0 : i64, tpu.core_type = #tpu.core_type<tc>, window_params = [{transform_indices = @transform_0, window_bounds = array<i64: 1, 64, 32>}, {transform_indices = @transform_1, window_bounds = array<i64: 1, 8, 32>}, {transform_indices = @transform_2, window_bounds = array<i64: 1, 8, 32>}]} {
    %c0 = arith.constant 0 : index
    %c0_0 = arith.constant 0 : index
    %c0_1 = arith.constant 0 : index
    %0 = vector.load %arg2[%c0, %c0_0, %c0_1] : memref<1x8x32xf32, #tpu.memory_space<vmem>>, vector<1x8x32xf32>
    %1 = tpu.iota {dimensions = array<i32: 1>} : vector<1x8x64xi32>
    %c0_i32 = arith.constant 0 : i32
    %c100_i32 = arith.constant 100 : i32
    %2 = arith.addi %c0_i32, %c100_i32 : i32
    %c1_i32 = arith.constant 1 : i32
    %3 = scf.for %arg4 = %c0_i32 to %2 step %c1_i32 iter_args(%arg5 = %0) -> (vector<1x8x32xf32>)  : i32 {
      %c0_5 = arith.constant 0 : index
      %c0_6 = arith.constant 0 : index
      %c0_7 = arith.constant 0 : index
      %5 = vector.load %arg1[%c0_5, %c0_6, %c0_7] : memref<1x64x32xf32, #tpu.memory_space<vmem>>, vector<1x64x32xf32>
      %6 = arith.mulf %arg5, %arg5 : vector<1x8x32xf32>
      %cst = arith.constant dense<0.000000e+00> : vector<1x8xf32>
      %7 = vector.multi_reduction <add>, %6, %cst [2] : vector<1x8x32xf32> to vector<1x8xf32>
      %8 = vector.shape_cast %7 : vector<1x8xf32> to vector<1x8x1xf32>
      "tpu.trace_start"() <{level = 10 : i32, message = "bkd,bnd->bkn"}> : () -> ()
      %cst_8 = arith.constant dense<0.000000e+00> : vector<1x8x64xf32>
      %9 = tpu.matmul %arg5, %5, %cst_8 {dimension_numbers = #tpu.dot_dimension_numbers<[2], [2], [1], [1], [0, 0, 0, 1, 1, 1], [0], [0]>} : vector<1x8x32xf32>, vector<1x64x32xf32>, vector<1x8x64xf32> -> vector<1x8x64xf32>
      "tpu.trace_stop"() : () -> ()
      %cst_9 = arith.constant 2.000000e+00 : f32
      %10 = vector.broadcast %cst_9 : f32 to vector<1x8x64xf32>
      %11 = arith.mulf %10, %9 : vector<1x8x64xf32>
      %12 = vector.broadcast %8 : vector<1x8x1xf32> to vector<1x8x64xf32>
      %13 = arith.subf %12, %11 : vector<1x8x64xf32>
      %cst_10 = arith.constant dense<0x7F800000> : vector<1x64xf32>
      %14 = vector.multi_reduction <minimumf>, %13, %cst_10 [1] : vector<1x8x64xf32> to vector<1x64xf32>
      %15 = vector.shape_cast %14 : vector<1x64xf32> to vector<1x1x64xf32>
      %16 = vector.broadcast %15 : vector<1x1x64xf32> to vector<1x8x64xf32>
      %17 = arith.cmpf ole, %13, %16 : vector<1x8x64xf32>
      %c8_i32 = arith.constant 8 : i32
      %18 = vector.broadcast %c8_i32 : i32 to vector<1x8x64xi32>
      %19 = arith.select %17, %1, %18 : vector<1x8x64xi1>, vector<1x8x64xi32>
      %cst_11 = arith.constant dense<2147483647> : vector<1x64xi32>
      %20 = vector.multi_reduction <minsi>, %19, %cst_11 [1] : vector<1x8x64xi32> to vector<1x64xi32>
      %21 = vector.shape_cast %20 : vector<1x64xi32> to vector<1x1x64xi32>
      %22 = vector.broadcast %21 : vector<1x1x64xi32> to vector<1x8x64xi32>
      %23 = arith.cmpi eq, %1, %22 : vector<1x8x64xi32>
      %24 = arith.extui %23 : vector<1x8x64xi1> to vector<1x8x64xi32>
      %25 = arith.sitofp %24 : vector<1x8x64xi32> to vector<1x8x64xf32>
      %cst_12 = arith.constant dense<0.000000e+00> : vector<1x8xf32>
      %26 = vector.multi_reduction <add>, %25, %cst_12 [2] : vector<1x8x64xf32> to vector<1x8xf32>
      %27 = vector.shape_cast %26 : vector<1x8xf32> to vector<1x8x1xf32>
      "tpu.trace_start"() <{level = 10 : i32, message = "bkn,bnd->bkd"}> : () -> ()
      %cst_13 = arith.constant dense<0.000000e+00> : vector<1x8x32xf32>
      %28 = tpu.matmul %25, %5, %cst_13 {dimension_numbers = #tpu.dot_dimension_numbers<[2], [1], [1], [2], [0, 0, 0, 1, 1, 2], [0], [0]>} : vector<1x8x64xf32>, vector<1x64x32xf32>, vector<1x8x32xf32> -> vector<1x8x32xf32>
      "tpu.trace_stop"() : () -> ()
      %cst_14 = arith.constant 1.000000e+00 : f32
      %29 = vector.broadcast %cst_14 : f32 to vector<1x8x1xf32>
      %30 = arith.maximumf %27, %29 : vector<1x8x1xf32>
      %31 = tpu.reciprocal %30 : vector<1x8x1xf32> -> vector<1x8x1xf32>
      %32 = vector.broadcast %31 : vector<1x8x1xf32> to vector<1x8x32xf32>
      %33 = arith.mulf %28, %32 : vector<1x8x32xf32>
      scf.yield %33 : vector<1x8x32xf32>
    }
    %c0_2 = arith.constant 0 : index
    %c0_3 = arith.constant 0 : index
    %c0_4 = arith.constant 0 : index
    %4 = vector.load %arg3[%c0_2, %c0_3, %c0_4] : memref<1x8x32xf32, #tpu.memory_space<vmem>>, vector<1x8x32xf32>
    tpu.vector_store %arg3[%c0_2, %c0_3, %c0_4], %3 {strides = array<i32>} : memref<1x8x32xf32, #tpu.memory_space<vmem>>, vector<1x8x32xf32>,
    return
  }
  func.func @transform_0(%arg0: i32) -> (i32, i32, i32) {
    %c0_i32 = arith.constant 0 : i32
    %c0_i32_0 = arith.constant 0 : i32
    %c0_i32_1 = arith.constant 0 : i32
    return %arg0, %c0_i32, %c0_i32_0 : i32, i32, i32
  }
  func.func @transform_1(%arg0: i32) -> (i32, i32, i32) {
    %c0_i32 = arith.constant 0 : i32
    %c0_i32_0 = arith.constant 0 : i32
    %c0_i32_1 = arith.constant 0 : i32
    return %arg0, %c0_i32, %c0_i32_0 : i32, i32, i32
  }
  func.func @transform_2(%arg0: i32) -> (i32, i32, i32) {
    %c0_i32 = arith.constant 0 : i32
    %c0_i32_0 = arith.constant 0 : i32
    %c0_i32_1 = arith.constant 0 : i32
    return %arg0, %c0_i32, %c0_i32_0 : i32, i32, i32
  }
}

</mosaic_0001>

<llo_original>
// kernel: tpu_custom_call.1
$region0: #{tpu_custom_call.1}
  #allocation0 [shape = 'u32[]', space=smem, size = 0x4, offset = 0x4, fixed_abs, tag = 'smem constant byte address 0x4 - core index']
  #allocation1 [shape = 'u32[72,128]{1,0:T(1,128)}', space=vmem, size = 0x9000, scoped, tag = 'internal scratch']
  %s0 = inlined_call_operand.vmem [shape: f32[2,64,32], index: 0, kind: input, shape index: {}]
  %s1 = inlined_call_operand.vmem [shape: f32[2,8,32], index: 1, kind: input, shape index: {}]
  %s2 = inlined_call_operand.hbm [shape: f32[2,8,32], index: 2, kind: output, shape index: {}]
  %s3 = sld [smem:[#allocation0]]
  $region48: #{tpu_custom_call.1} parent=0
    _
  %s5 = ssub.s32 1, %s3
  %s6 = scalar_select 0, %s5, %s3
  $region1: #{tpu_custom_call.1} parent=0
    #allocation2 [shape = 'u8[8192]{0}', space=vmem, size = 0x2000, scoped, tag = 'output window, operand 0']
    #allocation3 [shape = 's32[2]{0}', space=sflag, size = 0x8, scoped, tag = 'scoped memory for tpu_custom_call.1']
    %7 = vsyncpa [#allocation3], 0
    %s8 = scalar_lea.sflag [#allocation3], 1
    %9 = vsyncpa %s8, 0
    loop: start=0, step=1, limit=4
    $region2: #{tpu_custom_call.1} parent=1 // loop_pre_header
      _
    $region3: #{tpu_custom_call.1} parent=1 // loop_header
      %s11 = sphi 0, %s15
      %p12 = scmp.ge.s32.totalorder %s11, 4
      %s21 = sphi 0, %s23
      %s24 = sphi 0, %s21
      %s25 = sphi 0, %s24
      %s41 = sphi 0, %s25
      %s47 = sphi 0, %s49
      %s50 = sphi 0, %s47
      %s51 = sphi 0, %s50
      %s67 = sphi 0, %s51
      %s73 = sphi 0, %s75
      %s76 = sphi 0, %s73
      %s77 = sphi 0, %s76
      %s93 = sphi 0, %s77
    $region4: #{tpu_custom_call.1} parent=1 // loop_header_branch
      %14 = sbr.rel (%p12) target = $region8
    $region5: #{tpu_custom_call.1} parent=1 // loop_body
      %s16 = ssub.s32 %s11, 1
      %s17 = ssub.s32 %s11, 2
      %s18 = sadd.s32 %s11, 1
      %s19 = ssub.s32 %s11, %s18
      %p20 = scmp.eq.s32.totalorder %s19, 0
      %s22 = sadd.s32 %s21, 1
      %s23 = scalar_select %p20, %s21, %s22
      %p26 = pneg %p20
      %p27 = scmp.eq.s32.totalorder %s11, 1
      %p28 = por %p26, %p27
      %p29 = scmp.ne.s32.totalorder %s21, %s24
      %p30 = scmp.eq.s32.totalorder %s11, 0
      %p31 = por %p29, %p30
      %p32 = scmp.ne.s32.totalorder %s21, %s24
      %p33 = scmp.eq.s32.totalorder %s16, 1
      %p34 = por %p32, %p33
      %p35 = scmp.ne.s32.totalorder %s24, %s25
      %p36 = scmp.eq.s32.totalorder %s16, 0
      %p37 = por %p35, %p36
      %p38 = scmp.ne.s32.totalorder %s24, %s25
      %p39 = scmp.eq.s32.totalorder %s17, 1
      %p40 = por %p38, %p39
      %p42 = scmp.ne.s32.totalorder %s25, %s41
      %p43 = scmp.eq.s32.totalorder %s17, 0
      %p44 = por %p42, %p43
      %s45 = ssub.s32 %s11, %s18
      %p46 = scmp.eq.s32.totalorder %s45, 0
      %s48 = sadd.s32 %s47, 1
      %s49 = scalar_select %p46, %s47, %s48
      %p52 = pneg %p46
      %p53 = scmp.eq.s32.totalorder %s11, 1
      %p54 = por %p52, %p53
      %p55 = scmp.ne.s32.totalorder %s47, %s50
      %p56 = scmp.eq.s32.totalorder %s11, 0
      %p57 = por %p55, %p56
      %p58 = scmp.ne.s32.totalorder %s47, %s50
      %p59 = scmp.eq.s32.totalorder %s16, 1
      %p60 = por %p58, %p59
      %p61 = scmp.ne.s32.totalorder %s50, %s51
      %p62 = scmp.eq.s32.totalorder %s16, 0
      %p63 = por %p61, %p62
      %p64 = scmp.ne.s32.totalorder %s50, %s51
      %p65 = scmp.eq.s32.totalorder %s17, 1
      %p66 = por %p64, %p65
      %p68 = scmp.ne.s32.totalorder %s51, %s67
      %p69 = scmp.eq.s32.totalorder %s17, 0
      %p70 = por %p68, %p69
      %s71 = ssub.s32 %s11, %s18
      %p72 = scmp.eq.s32.totalorder %s71, 0
      %s74 = sadd.s32 %s73, 1
      %s75 = scalar_select %p72, %s73, %s74
      %p78 = pneg %p72
      %p79 = scmp.eq.s32.totalorder %s11, 1
      %p80 = por %p78, %p79
      %p81 = scmp.ne.s32.totalorder %s73, %s76
      %p82 = scmp.eq.s32.totalorder %s11, 0
      %p83 = por %p81, %p82
      %p84 = scmp.ne.s32.totalorder %s73, %s76
      %p85 = scmp.eq.s32.totalorder %s16, 1
      %p86 = por %p84, %p85
      %p87 = scmp.ne.s32.totalorder %s76, %s77
      %p88 = scmp.eq.s32.totalorder %s16, 0
      %p89 = por %p87, %p88
      %p90 = scmp.ne.s32.totalorder %s76, %s77
      %p91 = scmp.eq.s32.totalorder %s17, 1
      %p92 = por %p90, %p91
      %p94 = scmp.ne.s32.totalorder %s77, %s93
      %p95 = scmp.eq.s32.totalorder %s17, 0
      %p96 = por %p94, %p95
      %p97 = scmp.le.s32.totalorder 1, %s11
      %p98 = scmp.lt.s32.totalorder %s11, 3
      %p99 = pnand %p97, %p98
      %p100 = pneg %p99
      // Predicated region
      $region9: #{tpu_custom_call.1} parent=5 // pred_check
        _
      $region10: #{tpu_custom_call.1} parent=5 // pred_check_branch
        %102 = sbr.rel (%p99) target = $region12
      $region11: #{tpu_custom_call.1} parent=5 // pred_region
        %s103 = ssub.s32 %s11, 1
      $region12: #{tpu_custom_call.1} parent=5 // pred_fallthru
        _
      %p104 = scmp.lt.s32.totalorder %s11, 2
      // Predicated region
      $region13: #{tpu_custom_call.1} parent=5 // pred_check
        %p105 = pneg %p104
      $region14: #{tpu_custom_call.1} parent=5 // pred_check_branch
        %107 = sbr.rel (%p105) target = $region16
      $region15: #{tpu_custom_call.1} parent=5 // pred_region
        // Predicated region
        $region17: #{tpu_custom_call.1} parent=15 // pred_check
          %p108 = pneg %p31
        $region18: #{tpu_custom_call.1} parent=15 // pred_check_branch
          %110 = sbr.rel (%p108) target = $region20
        $region19: #{tpu_custom_call.1} parent=15 // pred_region
          %p111 = scmp.lt.s32.totalorder %s11, 1
          %s112 = scalar_select %p111, %s11, 1
          %s113 = smul.addr %s112, 8
          %s114 = smul.addr %s113, 8
          %s115 = scalar_lea.vmem %s0, %s114
        $region20: #{tpu_custom_call.1} parent=15 // pred_fallthru
          _
        // Predicated region
        $region21: #{tpu_custom_call.1} parent=15 // pred_check
          %p116 = pneg %p57
        $region22: #{tpu_custom_call.1} parent=15 // pred_check_branch
          %118 = sbr.rel (%p116) target = $region24
        $region23: #{tpu_custom_call.1} parent=15 // pred_region
          %p119 = scmp.lt.s32.totalorder %s11, 1
          %s120 = scalar_select %p119, %s11, 1
          %s121 = smul.addr %s120, 8
          %s122 = scalar_lea.vmem %s1, %s121
        $region24: #{tpu_custom_call.1} parent=15 // pred_fallthru
          _
      $region16: #{tpu_custom_call.1} parent=5 // pred_fallthru
        _
      %p123 = scmp.le.s32.totalorder 1, %s11
      %p124 = scmp.lt.s32.totalorder %s11, 3
      %p125 = pnand %p123, %p124
      %p126 = pneg %p125
      // Predicated region
      $region25: #{tpu_custom_call.1} parent=5 // pred_check
        _
      $region26: #{tpu_custom_call.1} parent=5 // pred_check_branch
        %128 = sbr.rel (%p125) target = $region28
      $region27: #{tpu_custom_call.1} parent=5 // pred_region
        %s129 = ssub.s32 %s11, 1
        %p130 = scmp.lt.s32.totalorder %s16, 1
        %s131 = scalar_select %p130, %s16, 1
        %s132 = smul.addr %s131, 8
        %s133 = smul.addr %s132, 8
        %s134 = scalar_lea.vmem %s0, %s133
        %p135 = pneg %p37
        %p136 = pneg %p34
        %p137 = scmp.lt.s32.totalorder %s16, 1
        %s138 = scalar_select %p137, %s16, 1
        %s139 = smul.addr %s138, 8
        %s140 = scalar_lea.vmem %s1, %s139
        %p141 = pneg %p63
        %p142 = pneg %p60
        %p143 = pneg %p89
        %p144 = pneg %p86
        %s145 = sand.u32 %s76, 1
        %s146 = scalar_lea.sflag [#allocation3], %s145
        %s147 = sand.u32 %s76, 1
        %s148 = smul.addr %s147, 8
        %s149 = scalar_lea.vmem [#allocation2], %s148
        %p150 = scmp.lt.s32.totalorder %s16, 1
        %s151 = scalar_select %p150, %s16, 1
        %s152 = smul.addr %s151, 8
        %s153 = smul.addr %s152, 8
        %s154 = scalar_lea.vmem %s0, %s153
        %p155 = scmp.lt.s32.totalorder %s16, 1
        %s156 = scalar_select %p155, %s16, 1
        %s157 = smul.addr %s156, 8
        %s158 = scalar_lea.vmem %s1, %s157
        %v159 = vld [vmem:[%s158] sm:$0xff]
        %v160 = vlaneseq
        %v161 = vshrl.u32 %v160, 7
        loop: start=0, step=1, limit=100
        $region29: #{tpu_custom_call.1} parent=27 // loop_pre_header
          _
        $region30: #{tpu_custom_call.1} parent=27 // loop_header
          %s163 = sphi 0, %s167
          %p164 = scmp.ge.s32.totalorder %s163, 100
          %v168 = vphi %v159, %v295
        $region31: #{tpu_custom_call.1} parent=27 // loop_header_branch
          %166 = sbr.rel (%p164) target = $region35
        $region32: #{tpu_custom_call.1} parent=27 // loop_body
          %v169 = vld [vmem:[%s154] sm:$0xff]
          %v170 = vld [vmem:[%s154 + $0x8] sm:$0xff]
          %v171 = vld [vmem:[%s154 + $0x10] sm:$0xff]
          %v172 = vld [vmem:[%s154 + $0x18] sm:$0xff]
          %v173 = vld [vmem:[%s154 + $0x20] sm:$0xff]
          %v174 = vld [vmem:[%s154 + $0x28] sm:$0xff]
          %v175 = vld [vmem:[%s154 + $0x30] sm:$0xff]
          %v176 = vld [vmem:[%s154 + $0x38] sm:$0xff]
          %v177 = vmul.f32 %v168, %v168
          %vm178 = vcmask 261120
          %v179 = vsel %vm178, %v177, 0.0
          %180 = vadd.xlane.f32.xlu0 %v179
          %v181 = vpop.xlane.xlu0 %180
          %v183 = vsel %vm178, %v168, 0
          %v186 = vsel %vm178, %v169, 0
          %v189 = vsel %vm178, %v170, 0
          %v192 = vsel %vm178, %v171, 0
          %v195 = vsel %vm178, %v172, 0
          %v198 = vsel %vm178, %v173, 0
          %v201 = vsel %vm178, %v174, 0
          %v204 = vsel %vm178, %v175, 0
          %v207 = vsel %vm178, %v176, 0
          %209 = vmatpush.xpose.msra.mxu0 0.0
          %210 = vmatpush.xpose.msra.mxu0 0.0
          %211 = vmatpush.xpose.msra.mxu0 0.0
          %212 = vmatpush.xpose.msra.mxu0 0.0
          %213 = vmatpush.xpose.msra.mxu0 0.0
          %214 = vmatpush.xpose.msra.mxu0 0.0
          %215 = vmatpush.xpose.msra.mxu0 0.0
          %216 = vmatpush.xpose.msra.mxu0 0.0
          %217 = vmatpush.xpose.msra.mxu0 %v207
          %218 = vmatpush.xpose.msra.mxu0 %v204
          %219 = vmatpush.xpose.msra.mxu0 %v201
          %220 = vmatpush.xpose.msra.mxu0 %v198
          %221 = vmatpush.xpose.msra.mxu0 %v195
          %222 = vmatpush.xpose.msra.mxu0 %v192
          %223 = vmatpush.xpose.msra.mxu0 %v189
          %224 = vmatpush.xpose.msra.mxu0 %v186
          %225 = vmatmul.f32.gmra.mxu0 %v183
          %v226 = vpop.f32.mrf.mxu0
          %v227 = vadd.f32 0.0, %v226
          %228 = vdwg.mxu0
          %v229 = vmul.f32 %v227, 2.0
          %v230 = vsub.f32 %v181, %v229
          %vm231 = vcmask 523264
          %v232 = vsel %vm231, %v230, inf
          %v233 = vrot.slane %v232, 4
          %v234 = vmin.f32 %v232, %v233
          %v235 = vrot.slane %v234, 2
          %v236 = vmin.f32 %v234, %v235
          %v237 = vrot.slane %v236, 1
          %v238 = vmin.f32 %v236, %v237
          %vm239 = vcmp.le.f32.partialorder %v230, %v238
          %v240 = vsel %vm239, %v161, 8
          %v241 = vsel %vm231, %v240, 2147483647
          %v242 = vrot.slane %v241, 4
          %vm243 = vcmp.lt.s32.totalorder %v241, %v242
          %v244 = vsel %vm243, %v241, %v242
          %v245 = vrot.slane %v244, 2
          %vm246 = vcmp.lt.s32.totalorder %v244, %v245
          %v247 = vsel %vm246, %v244, %v245
          %v248 = vrot.slane %v247, 1
          %vm249 = vcmp.lt.s32.totalorder %v247, %v248
          %v250 = vsel %vm249, %v247, %v248
          %vm251 = vcmp.eq.s32.totalorder %v161, %v250
          %v252 = vsel %vm251, 1, 0
          %v253 = vcvt.s32.f32 %v252
          %v254 = vsel %vm231, %v253, 0.0
          %255 = vadd.xlane.f32.xlu0 %v254
          %v256 = vpop.xlane.xlu0 %255
          %v258 = vsel %vm231, %v253, 0
          %260 = vmatpush.msra.mxu0 0.0
          %261 = vmatpush.msra.mxu0 0.0
          %262 = vmatpush.msra.mxu0 0.0
          %263 = vmatpush.msra.mxu0 0.0
          %264 = vmatpush.msra.mxu0 0.0
          %265 = vmatpush.msra.mxu0 0.0
          %266 = vmatpush.msra.mxu0 0.0
          %267 = vmatpush.msra.mxu0 0.0
          %268 = vmatpush.msra.mxu0 %v176
          %269 = vmatpush.msra.mxu0 %v175
          %270 = vmatpush.msra.mxu0 %v174
          %271 = vmatpush.msra.mxu0 %v173
          %272 = vmatpush.msra.mxu0 %v172
          %273 = vmatpush.msra.mxu0 %v171
          %274 = vmatpush.msra.mxu0 %v170
          %275 = vmatpush.msra.mxu0 %v169
          %276 = vmatmul.f32.gmra.mxu0 %v258
          %v277 = vpop.f32.mrf.mxu0
          %v278 = vadd.f32 0.0, %v277
          %279 = vdwg.mxu0
          %v280 = vmax.f32 %v256, 1.0
          %v281 = vrcp.pop %v280
          %v282 = vmul.f32 %v280, %v281
          %v283 = vsub.f32 1.0, %v282
          %v284 = vmul.f32 %v281, %v283
          %v285 = vadd.f32 %v281, %v284
          %vm286 = vweird.f32 %v280
          %vm287 = vweird.f32 %v281
          %vm288 = vmor %vm286, %vm287
          %v289 = vsel %vm288, %v281, %v285
          %v290 = vand.u32 2147483647, %v280
          %vm291 = vcmp.eq.f32.partialorder %v290, 8.507059e+37
          %v292 = vand.u32 %v280, 2147483648
          %v293 = vor.u32 1.1754944e-38, %v292
          %v294 = vsel %vm291, %v293, %v289
          %v295 = vmul.f32 %v278, %v294
        $region33: #{tpu_custom_call.1} parent=27 // loop_footer
          %s167 = sadd.s32 1, %s163
        $region34: #{tpu_custom_call.1} parent=27 // loop_footer_branch
          %162 = sbr.rel target = $region30
        $region35: #{tpu_custom_call.1} parent=27 // loop_exit
          _
        %vm296 = vcmask 261120
        %297 = vst.msk [vmem:[%s149] sm:$0xff] %vm296, %v168
        %s298 = sand.u32 %s76, 1
        %s299 = scalar_lea.sflag [#allocation3], %s298
        %s300 = sand.u32 %s76, 1
        %s301 = smul.addr %s300, 8
        %s302 = scalar_lea.vmem [#allocation2], %s301
        // Predicated region
        $region36: #{tpu_custom_call.1} parent=27 // pred_check
          %p303 = pneg %p86
        $region37: #{tpu_custom_call.1} parent=27 // pred_check_branch
          %305 = sbr.rel (%p303) target = $region39
        $region38: #{tpu_custom_call.1} parent=27 // pred_region
          %307 = vsyncadd %s299, 0
          %s308 = smul.addr %s16, 8
          %s309 = scalar_lea.hbm %s2, %s308
          %s311 = sshll.u32 %s302, 4
          %s312 = int_to_ptr.vmem [resolvable:$true] %s311
          %s313 = sshll.u32 %s309, 4
          %s314 = int_to_ptr.hbm [resolvable:$true] %s313
          %316 = dma.vmem_to_hbm [thread:$0]  %s312, 128, %s314, %s299
        $region39: #{tpu_custom_call.1} parent=27 // pred_fallthru
          _
      $region28: #{tpu_custom_call.1} parent=5 // pred_fallthru
        _
      %p317 = scmp.le.s32.totalorder 2, %s11
      // Predicated region
      $region40: #{tpu_custom_call.1} parent=5 // pred_check
        %p318 = pneg %p317
      $region41: #{tpu_custom_call.1} parent=5 // pred_check_branch
        %320 = sbr.rel (%p318) target = $region43
      $region42: #{tpu_custom_call.1} parent=5 // pred_region
        %s321 = ssub.s32 %s11, 2
        // Predicated region
        $region44: #{tpu_custom_call.1} parent=42 // pred_check
          %p322 = pneg %p92
        $region45: #{tpu_custom_call.1} parent=42 // pred_check_branch
          %324 = sbr.rel (%p322) target = $region47
        $region46: #{tpu_custom_call.1} parent=42 // pred_region
          %s325 = sand.u32 %s77, 1
          %s326 = scalar_lea.sflag [#allocation3], %s325
          %s327 = sand.u32 %s77, 1
          %s328 = smul.addr %s327, 8
          %s329 = scalar_lea.vmem [#allocation2], %s328
          %331 = dma.done %s326, 128
        $region47: #{tpu_custom_call.1} parent=42 // pred_fallthru
          _
      $region43: #{tpu_custom_call.1} parent=5 // pred_fallthru
        _
    $region6: #{tpu_custom_call.1} parent=1 // loop_footer
      %s15 = sadd.s32 1, %s11
    $region7: #{tpu_custom_call.1} parent=1 // loop_footer_branch
      %10 = sbr.rel target = $region3
    $region8: #{tpu_custom_call.1} parent=1 // loop_exit
      _
    %332 = vsyncpa [#allocation3], 1
    %s333 = scalar_lea.sflag [#allocation3], 1
    %334 = vsyncpa %s333, 1

</llo_original>
